<compile_context>
chip_gen: v7x
topology: tpu7x:2x2x1
jax: 0.10.0
libtpu: 0.0.40
codegen_flags: <defaults>
</compile_context>

<pallas_src>
import functools
import math

import jax
import jax.numpy as jnp
from jax.experimental import pallas as pl
from jax.experimental.pallas import tpu as pltpu


def _round_up(n, m):
    return ((int(n) + m - 1) // m) * m


def logistic_kernel(x_ref, w_ref, b_ref, o_ref, *, cb, compute_dtype):
    """One batch tile of sigmoid(x @ w^T + b), written lane-dense.

    x_ref: (tb, D)            native x dtype, VMEM (pipelined batch tile)
    w_ref: (1, D)             native w dtype, VMEM (constant block, DMA'd once)
    b_ref: (1,)               f32, SMEM scalar
    o_ref: (1, n_chunks, cb)  f32, VMEM; sublane c holds rows [c*cb, (c+1)*cb)
    """
    w = w_ref[...].astype(compute_dtype)          # (1, D), cast once in VMEM
    bias = b_ref[0]                               # scalar from SMEM
    n_chunks = o_ref.shape[1]

    def body(c, carry):
        off = pl.multiple_of(c * cb, cb)
        x = x_ref[pl.ds(off, cb), :].astype(compute_dtype)       # (cb, D)
        # z[0, j] = sum_d w[0, d] * x[j, d] -> (1, cb) lane-dense, f32 acc on MXU.
        z = jax.lax.dot_general(
            w, x, (((1,), (1,)), ((), ())),
            preferred_element_type=jnp.float32)                  # (1, cb)
        z = z + bias
        # Numerically-stable sigmoid on the EUP (exp + approximate reciprocal).
        t = jnp.exp(-jnp.abs(z))
        r = pl.reciprocal(1.0 + t, approx=True)
        p = jnp.where(z >= 0.0, r, t * r)                        # (1, cb) f32
        o_ref[:, pl.ds(c, 1), :] = p[None].astype(o_ref.dtype)   # (1, 1, cb)
        return carry

    # fori_loop (not a Python loop) bounds the live vreg range per chunk.
    jax.lax.fori_loop(0, n_chunks, body, 0, unroll=(n_chunks <= 2))


def _choose_tiles(B, D, x_itemsize):
    """Pick (tb, cb): rows per grid step and rows per in-kernel epilogue chunk."""
    Dp = _round_up(max(D, 1), 128)            # lane-padded feature width in VMEM
    # ~4 MiB x-tile per step (double-buffered ~8 MiB): past the HBM-roofline
    # knee on v5e/v6e/v7x, under every scoped-VMEM default.
    tb = (4 << 20) // (Dp * x_itemsize)
    tb = max(128, min(8192, tb))
    tb = min(tb, _round_up(B, 128))
    if B < 128:                               # tiny-batch latency path: one small step
        tb = _round_up(B, 8)
        return tb, tb
    if tb > 1024:
        tb = _round_up(tb, 1024)              # tb must be a multiple of the chunk
        cb = 1024
    else:
        tb = _round_up(tb, 128)
        cb = tb
    return tb, cb


def logistic_forward(x, w, b, *, tb=None, compute_dtype=jnp.bfloat16):
    """sigmoid(x @ w.T + b) for w:(1,D), b:(1,).  Returns (B, 1) float32."""
    if x.ndim == 1:
        # mirrors the unsqueeze(1) branch of the torch module for 1-D input
        x = x[None, :]
    B, D = x.shape
    assert w.shape == (1, D), w.shape
    assert b.shape == (1,), b.shape

    x_itemsize = x.dtype.itemsize
    if tb is None:
        tb, cb = _choose_tiles(B, D, x_itemsize)
    else:
        assert tb % 8 == 0, "tb must be a multiple of 8"
        cb = tb if tb <= 1024 else 1024
        assert tb % cb == 0, "tb must be a multiple of the 1024-row chunk"
    n_chunks = tb // cb
    num_tiles = int(pl.cdiv(B, tb))
    Dp = _round_up(max(D, 1), 128)

    bf = b.astype(jnp.float32)                # (1,) scalar -> SMEM

    # VMEM accounting (lane/sublane-padded, double-buffered) -> raise the
    # scoped limit only when a big feature dim actually needs it.
    x_tile_bytes = tb * Dp * x_itemsize
    out_tile_bytes = _round_up(n_chunks, 8) * cb * 4
    w_tile_bytes = 8 * Dp * w.dtype.itemsize
    vmem_need = 2 * (x_tile_bytes + out_tile_bytes + w_tile_bytes)
    cp_kwargs = dict(dimension_semantics=("parallel",))
    if vmem_need > (12 << 20):
        cp_kwargs["vmem_limit_bytes"] = int(min(vmem_need + (8 << 20), 48 << 20))

    cost = pl.CostEstimate(
        flops=int(2 * B * D),
        transcendentals=int(B),
        bytes_accessed=int(B * D * x_itemsize + D * w.dtype.itemsize + B * 4 + 4),
    )

    out = pl.pallas_call(
        functools.partial(logistic_kernel, cb=cb, compute_dtype=compute_dtype),
        out_shape=jax.ShapeDtypeStruct((num_tiles, n_chunks, cb), jnp.float32),
        grid_spec=pltpu.PrefetchScalarGridSpec(
            num_scalar_prefetch=0,
            grid=(num_tiles,),
            in_specs=[
                # x: pipelined batch tiles, native dtype, ragged tail masked by DMA
                pl.BlockSpec((tb, D), lambda i: (i, 0)),
                # w: constant block index -> fetched once, stays in VMEM
                pl.BlockSpec((1, D), lambda i: (0, 0)),
                # b: scalar in SMEM (no padded VMEM tile, no vld)
                pl.BlockSpec(memory_space=pltpu.MemorySpace.SMEM),
            ],
            # lane-dense output: batch on the lane axis, chunk on the sublane axis
            out_specs=pl.BlockSpec((1, n_chunks, cb), lambda i: (i, 0, 0)),
        ),
        compiler_params=pltpu.CompilerParams(**cp_kwargs),
        cost_estimate=cost,
    )(x, w, bf)

    # (num_tiles, n_chunks, cb) -> (num_tiles*tb, 1) -> drop OOB/garbage tail rows
    return out.reshape(num_tiles * n_chunks * cb, 1)[:B]


def logistic_reference(x, w, b, *, compute_dtype=jnp.float32):
    """Pure-JAX reference matching the kernel's matmul input precision."""
    if x.ndim == 1:
        x = x[None, :]
    xc = x.astype(compute_dtype).astype(jnp.float32)
    wc = w.astype(compute_dtype).astype(jnp.float32)
    z = xc @ wc.T + b.astype(jnp.float32)
    return jax.nn.sigmoid(z)


if __name__ == "__main__":
    key = jax.random.PRNGKey(0)
    kx, kw, kb = jax.random.split(key, 3)

    input_dim = 32
    batch = 1000                         # not a multiple of any tile -> ragged tail
    bound = 1.0 / math.sqrt(input_dim)   # PyTorch nn.Linear default init range

    x = jax.random.normal(kx, (batch, input_dim), dtype=jnp.float32)
    w = jax.random.uniform(kw, (1, input_dim), jnp.float32, -bound, bound)
    b = jax.random.uniform(kb, (1,), jnp.float32, -bound, bound)

    # Default bf16-MXU path (x stays f32 in HBM, cast in VMEM), auto tile.
    out = jax.block_until_ready(logistic_forward(x, w, b))
    ref = logistic_reference(x, w, b, compute_dtype=jnp.bfloat16)
    assert out.shape == (batch, 1), out.shape
    err = float(jnp.max(jnp.abs(out - ref)))
    assert err < 5e-3, f"bf16 path max err {err}"

    # f32 path, auto tile.
    out = jax.block_until_ready(logistic_forward(x, w, b, compute_dtype=jnp.float32))
    ref = logistic_reference(x, w, b, compute_dtype=jnp.float32)
    err = float(jnp.max(jnp.abs(out - ref)))
    assert err < 5e-3, f"f32 path max err {err}"

    # Multi-tile + multi-chunk path: grid of 2 steps, 2 epilogue chunks per
    # step, ragged tail handled by the masked DMA (no jnp.pad anywhere).
    x2 = jax.random.normal(kx, (3000, input_dim), dtype=jnp.float32)
    out = jax.block_until_ready(
        logistic_forward(x2, w, b, tb=2048, compute_dtype=jnp.float32))
    ref = logistic_reference(x2, w, b, compute_dtype=jnp.float32)
    assert out.shape == (3000, 1), out.shape
    err = float(jnp.max(jnp.abs(out - ref)))
    assert err < 5e-3, f"multi-tile path max err {err}"

    # 1-D input (the torch module unsqueezes 1-D logits to (1, 1)); takes the
    # tiny-batch single-step path.
    out = jax.block_until_ready(
        logistic_forward(x[0], w, b, compute_dtype=jnp.float32))
    ref = logistic_reference(x[0], w, b, compute_dtype=jnp.float32)
    assert out.shape == (1, 1), out.shape
    assert float(jnp.max(jnp.abs(out - ref))) < 5e-3

    print("KERNEL_OK")
</pallas_src>

<mosaic_0001>
module attributes {stable_mosaic.version = 11 : i64} {
  func.func @logistic_kernel(%arg0: i32, %arg1: memref<1024x32xf32, #tpu.memory_space<vmem>>, %arg2: memref<1x32xf32, #tpu.memory_space<vmem>>, %arg3: memref<1xf32, #tpu.memory_space<smem>>, %arg4: memref<1x1x1024xf32, #tpu.memory_space<vmem>>) attributes {dimension_semantics = [#tpu.dimension_semantics<parallel>], iteration_bounds = array<i64: 1>, scalar_prefetch = 0 : i64, scratch_operands = 0 : i64, tpu.core_type = #tpu.core_type<tc>, window_params = [{transform_indices = @transform_0, window_bounds = array<i64: 1024, 32>}, {pipeline_mode = #tpu.pipeline_mode<synchronous>, transform_indices = @transform_1, window_bounds = array<i64: 1, 32>}, {transform_indices = @transform_2, window_bounds = array<i64: 1>}, {transform_indices = @transform_3, window_bounds = array<i64: 1, 1, 1024>}]} {
    %c0 = arith.constant 0 : index
    %c0_0 = arith.constant 0 : index
    %0 = vector.load %arg2[%c0, %c0_0] : memref<1x32xf32, #tpu.memory_space<vmem>>, vector<1x32xf32>
    %1 = arith.truncf %0 : vector<1x32xf32> to vector<1x32xbf16>
    %c0_1 = arith.constant 0 : index
    %2 = memref.load %arg3[%c0_1] : memref<1xf32, #tpu.memory_space<smem>>
    %c0_i32 = arith.constant 0 : i32
    %c1024_i32 = arith.constant 1024 : i32
    %3 = arith.muli %c0_i32, %c1024_i32 : i32
    %4 = tpu.assume_multiple %3, 1024 : i32
    %5 = arith.index_cast %4 : i32 to index
    %c0_2 = arith.constant 0 : index
    %6 = vector.load %arg1[%5, %c0_2] : memref<1024x32xf32, #tpu.memory_space<vmem>>, vector<1024x32xf32>
    %7 = arith.truncf %6 : vector<1024x32xf32> to vector<1024x32xbf16>
    %cst = arith.constant dense<0.000000e+00> : vector<1x1024xf32>
    %8 = tpu.matmul %1, %7, %cst {dimension_numbers = #tpu.dot_dimension_numbers<[1], [1], [0], [0], [0, 0, 1, 0], [], []>} : vector<1x32xbf16>, vector<1024x32xbf16>, vector<1x1024xf32> -> vector<1x1024xf32>
    %9 = vector.broadcast %2 : f32 to vector<1x1024xf32>
    %10 = arith.addf %8, %9 : vector<1x1024xf32>
    %11 = math.absf %10 : vector<1x1024xf32>
    %cst_3 = arith.constant 0.000000e+00 : f32
    %12 = vector.broadcast %cst_3 : f32 to vector<1x1024xf32>
    %13 = arith.subf %12, %11 : vector<1x1024xf32>
    %14 = math.exp %13 : vector<1x1024xf32>
    %cst_4 = arith.constant 1.000000e+00 : f32
    %15 = vector.broadcast %cst_4 : f32 to vector<1x1024xf32>
    %16 = arith.addf %15, %14 : vector<1x1024xf32>
    %17 = tpu.reciprocal %16 {approx = true} : vector<1x1024xf32> -> vector<1x1024xf32>
    %cst_5 = arith.constant 0.000000e+00 : f32
    %18 = vector.broadcast %cst_5 : f32 to vector<1x1024xf32>
    %19 = arith.cmpf oge, %10, %18 : vector<1x1024xf32>
    %20 = arith.mulf %14, %17 : vector<1x1024xf32>
    %21 = arith.select %19, %17, %20 : vector<1x1024xi1>, vector<1x1024xf32>
    %22 = vector.shape_cast %21 : vector<1x1024xf32> to vector<1x1x1024xf32>
    %c0_6 = arith.constant 0 : index
    %23 = arith.index_cast %c0_i32 : i32 to index
    %c0_7 = arith.constant 0 : index
    %24 = vector.load %arg4[%c0_6, %23, %c0_7] : memref<1x1x1024xf32, #tpu.memory_space<vmem>>, vector<1x1x1024xf32>
    tpu.vector_store %arg4[%c0_6, %23, %c0_7], %22 {strides = array<i32>} : memref<1x1x1024xf32, #tpu.memory_space<vmem>>, vector<1x1x1024xf32>,
    %c1_i32 = arith.constant 1 : i32
    return
  }
  func.func @transform_0(%arg0: i32) -> (i32, i32) {
    %c0_i32 = arith.constant 0 : i32
    %c0_i32_0 = arith.constant 0 : i32
    return %arg0, %c0_i32 : i32, i32
  }
  func.func @transform_1(%arg0: i32) -> (i32, i32) {
    %c0_i32 = arith.constant 0 : i32
    %c0_i32_0 = arith.constant 0 : i32
    %c0_i32_1 = arith.constant 0 : i32
    return %c0_i32, %c0_i32_0 : i32, i32
  }
  func.func @transform_2(%arg0: i32) -> i32 {
    %c0_i32 = arith.constant 0 : i32
    %c0_i32_0 = arith.constant 0 : i32
    return %c0_i32 : i32
  }
  func.func @transform_3(%arg0: i32) -> (i32, i32, i32) {
    %c0_i32 = arith.constant 0 : i32
    %c0_i32_0 = arith.constant 0 : i32
    %c0_i32_1 = arith.constant 0 : i32
    return %arg0, %c0_i32, %c0_i32_0 : i32, i32, i32
  }
}

</mosaic_0001>

<llo_original>
// kernel: tpu_custom_call.1
$region0: #{tpu_custom_call.1}
  #allocation0 [shape = 'u32[]', space=smem, size = 0x4, offset = 0x4, fixed_abs, tag = 'smem constant byte address 0x4 - core index']
  #allocation1 [shape = 'u32[144,128]{1,0:T(1,128)}', space=vmem, size = 0x12000, scoped, tag = 'internal scratch']
  #allocation2 [shape = 'f32[1]{0:T(128)S(6)}', space=smem, size = 0x200, scoped, tag = 'scoped memory for tpu_custom_call.1']
  %s0 = inlined_call_operand.vmem [shape: f32[1000,32], index: 0, kind: input, shape index: {}]
  %s1 = inlined_call_operand.vmem [shape: f32[1,32], index: 1, kind: input, shape index: {}]
  %s2 = inlined_call_operand.<no memory space> [shape: f32[1], index: 2, kind: input, shape index: {}]
  %s3 = inlined_call_operand.hbm [shape: f32[1,1,1024], index: 3, kind: output, shape index: {}]
  %s4 = sld [smem:[#allocation0]]
  $region22: #{tpu_custom_call.1} parent=0
    _
  %s6 = ssub.s32 1, %s4
  %s7 = scalar_select 0, %s6, %s4
  %8 = sst [smem:[#allocation2]] %s2
  $region1: #{tpu_custom_call.1} parent=0
    #allocation3 [shape = 'u8[4096]{0}', space=vmem, size = 0x1000, scoped, tag = 'output window, operand 0, single buffered']
    #allocation4 [shape = 's32[1]{0}', space=sflag, size = 0x4, scoped, tag = 'scoped memory for tpu_custom_call.1']
    %9 = vsyncpa [#allocation4], 0
    // Predicated region
    $region2: #{tpu_custom_call.1} parent=1 // pred_check
      _
    $region3: #{tpu_custom_call.1} parent=1 // pred_check_branch
      %11 = sbr.rel (0) target = $region5
    $region4: #{tpu_custom_call.1} parent=1 // pred_region
      _
    $region5: #{tpu_custom_call.1} parent=1 // pred_fallthru
      _
    // Predicated region
    $region6: #{tpu_custom_call.1} parent=1 // pred_check
      _
    $region7: #{tpu_custom_call.1} parent=1 // pred_check_branch
      %13 = sbr.rel (0) target = $region9
    $region8: #{tpu_custom_call.1} parent=1 // pred_region
      _
    $region9: #{tpu_custom_call.1} parent=1 // pred_fallthru
      _
    // Predicated region
    $region10: #{tpu_custom_call.1} parent=1 // pred_check
      _
    $region11: #{tpu_custom_call.1} parent=1 // pred_check_branch
      %15 = sbr.rel (0) target = $region13
    $region12: #{tpu_custom_call.1} parent=1 // pred_region
      _
    $region13: #{tpu_custom_call.1} parent=1 // pred_fallthru
      _
    %v17 = vld [vmem:[%s1] sm:$0x1]
    %v18 = vpack.c.bf16 %v17, %v17
    %s19 = sld [smem:[#allocation2]]
    %v20 = vld [vmem:[%s0] sm:$0xff]
    %v21 = vld [vmem:[%s0 + $0x8] sm:$0xff]
    %v22 = vld [vmem:[%s0 + $0x10] sm:$0xff]
    %v23 = vld [vmem:[%s0 + $0x18] sm:$0xff]
    %v24 = vld [vmem:[%s0 + $0x20] sm:$0xff]
    %v25 = vld [vmem:[%s0 + $0x28] sm:$0xff]
    %v26 = vld [vmem:[%s0 + $0x30] sm:$0xff]
    %v27 = vld [vmem:[%s0 + $0x38] sm:$0xff]
    %v28 = vld [vmem:[%s0 + $0x40] sm:$0xff]
    %v29 = vld [vmem:[%s0 + $0x48] sm:$0xff]
    %v30 = vld [vmem:[%s0 + $0x50] sm:$0xff]
    %v31 = vld [vmem:[%s0 + $0x58] sm:$0xff]
    %v32 = vld [vmem:[%s0 + $0x60] sm:$0xff]
    %v33 = vld [vmem:[%s0 + $0x68] sm:$0xff]
    %v34 = vld [vmem:[%s0 + $0x70] sm:$0xff]
    %v35 = vld [vmem:[%s0 + $0x78] sm:$0xff]
    %v36 = vld [vmem:[%s0 + $0x80] sm:$0xff]
    %v37 = vld [vmem:[%s0 + $0x88] sm:$0xff]
    %v38 = vld [vmem:[%s0 + $0x90] sm:$0xff]
    %v39 = vld [vmem:[%s0 + $0x98] sm:$0xff]
    %v40 = vld [vmem:[%s0 + $0xa0] sm:$0xff]
    %v41 = vld [vmem:[%s0 + $0xa8] sm:$0xff]
    %v42 = vld [vmem:[%s0 + $0xb0] sm:$0xff]
    %v43 = vld [vmem:[%s0 + $0xb8] sm:$0xff]
    %v44 = vld [vmem:[%s0 + $0xc0] sm:$0xff]
    %v45 = vld [vmem:[%s0 + $0xc8] sm:$0xff]
    %v46 = vld [vmem:[%s0 + $0xd0] sm:$0xff]
    %v47 = vld [vmem:[%s0 + $0xd8] sm:$0xff]
    %v48 = vld [vmem:[%s0 + $0xe0] sm:$0xff]
    %v49 = vld [vmem:[%s0 + $0xe8] sm:$0xff]
    %v50 = vld [vmem:[%s0 + $0xf0] sm:$0xff]
    %v51 = vld [vmem:[%s0 + $0xf8] sm:$0xff]
    %v52 = vld [vmem:[%s0 + $0x100] sm:$0xff]
    %v53 = vld [vmem:[%s0 + $0x108] sm:$0xff]
    %v54 = vld [vmem:[%s0 + $0x110] sm:$0xff]
    %v55 = vld [vmem:[%s0 + $0x118] sm:$0xff]
    %v56 = vld [vmem:[%s0 + $0x120] sm:$0xff]
    %v57 = vld [vmem:[%s0 + $0x128] sm:$0xff]
    %v58 = vld [vmem:[%s0 + $0x130] sm:$0xff]
    %v59 = vld [vmem:[%s0 + $0x138] sm:$0xff]
    %v60 = vld [vmem:[%s0 + $0x140] sm:$0xff]
    %v61 = vld [vmem:[%s0 + $0x148] sm:$0xff]
    %v62 = vld [vmem:[%s0 + $0x150] sm:$0xff]
    %v63 = vld [vmem:[%s0 + $0x158] sm:$0xff]
    %v64 = vld [vmem:[%s0 + $0x160] sm:$0xff]
    %v65 = vld [vmem:[%s0 + $0x168] sm:$0xff]
    %v66 = vld [vmem:[%s0 + $0x170] sm:$0xff]
    %v67 = vld [vmem:[%s0 + $0x178] sm:$0xff]
    %v68 = vld [vmem:[%s0 + $0x180] sm:$0xff]
    %v69 = vld [vmem:[%s0 + $0x188] sm:$0xff]
    %v70 = vld [vmem:[%s0 + $0x190] sm:$0xff]
    %v71 = vld [vmem:[%s0 + $0x198] sm:$0xff]
    %v72 = vld [vmem:[%s0 + $0x1a0] sm:$0xff]
    %v73 = vld [vmem:[%s0 + $0x1a8] sm:$0xff]
    %v74 = vld [vmem:[%s0 + $0x1b0] sm:$0xff]
    %v75 = vld [vmem:[%s0 + $0x1b8] sm:$0xff]
    %v76 = vld [vmem:[%s0 + $0x1c0] sm:$0xff]
    %v77 = vld [vmem:[%s0 + $0x1c8] sm:$0xff]
    %v78 = vld [vmem:[%s0 + $0x1d0] sm:$0xff]
    %v79 = vld [vmem:[%s0 + $0x1d8] sm:$0xff]
    %v80 = vld [vmem:[%s0 + $0x1e0] sm:$0xff]
    %v81 = vld [vmem:[%s0 + $0x1e8] sm:$0xff]
    %v82 = vld [vmem:[%s0 + $0x1f0] sm:$0xff]
    %v83 = vld [vmem:[%s0 + $0x1f8] sm:$0xff]
    %v84 = vld [vmem:[%s0 + $0x200] sm:$0xff]
    %v85 = vld [vmem:[%s0 + $0x208] sm:$0xff]
    %v86 = vld [vmem:[%s0 + $0x210] sm:$0xff]
    %v87 = vld [vmem:[%s0 + $0x218] sm:$0xff]
    %v88 = vld [vmem:[%s0 + $0x220] sm:$0xff]
    %v89 = vld [vmem:[%s0 + $0x228] sm:$0xff]
    %v90 = vld [vmem:[%s0 + $0x230] sm:$0xff]
    %v91 = vld [vmem:[%s0 + $0x238] sm:$0xff]
    %v92 = vld [vmem:[%s0 + $0x240] sm:$0xff]
    %v93 = vld [vmem:[%s0 + $0x248] sm:$0xff]
    %v94 = vld [vmem:[%s0 + $0x250] sm:$0xff]
    %v95 = vld [vmem:[%s0 + $0x258] sm:$0xff]
    %v96 = vld [vmem:[%s0 + $0x260] sm:$0xff]
    %v97 = vld [vmem:[%s0 + $0x268] sm:$0xff]
    %v98 = vld [vmem:[%s0 + $0x270] sm:$0xff]
    %v99 = vld [vmem:[%s0 + $0x278] sm:$0xff]
    %v100 = vld [vmem:[%s0 + $0x280] sm:$0xff]
    %v101 = vld [vmem:[%s0 + $0x288] sm:$0xff]
    %v102 = vld [vmem:[%s0 + $0x290] sm:$0xff]
    %v103 = vld [vmem:[%s0 + $0x298] sm:$0xff]
    %v104 = vld [vmem:[%s0 + $0x2a0] sm:$0xff]
    %v105 = vld [vmem:[%s0 + $0x2a8] sm:$0xff]
    %v106 = vld [vmem:[%s0 + $0x2b0] sm:$0xff]
    %v107 = vld [vmem:[%s0 + $0x2b8] sm:$0xff]
    %v108 = vld [vmem:[%s0 + $0x2c0] sm:$0xff]
    %v109 = vld [vmem:[%s0 + $0x2c8] sm:$0xff]
    %v110 = vld [vmem:[%s0 + $0x2d0] sm:$0xff]
    %v111 = vld [vmem:[%s0 + $0x2d8] sm:$0xff]
    %v112 = vld [vmem:[%s0 + $0x2e0] sm:$0xff]
    %v113 = vld [vmem:[%s0 + $0x2e8] sm:$0xff]
    %v114 = vld [vmem:[%s0 + $0x2f0] sm:$0xff]
    %v115 = vld [vmem:[%s0 + $0x2f8] sm:$0xff]
    %v116 = vld [vmem:[%s0 + $0x300] sm:$0xff]
    %v117 = vld [vmem:[%s0 + $0x308] sm:$0xff]
    %v118 = vld [vmem:[%s0 + $0x310] sm:$0xff]
    %v119 = vld [vmem:[%s0 + $0x318] sm:$0xff]
    %v120 = vld [vmem:[%s0 + $0x320] sm:$0xff]
    %v121 = vld [vmem:[%s0 + $0x328] sm:$0xff]
    %v122 = vld [vmem:[%s0 + $0x330] sm:$0xff]
    %v123 = vld [vmem:[%s0 + $0x338] sm:$0xff]
    %v124 = vld [vmem:[%s0 + $0x340] sm:$0xff]
    %v125 = vld [vmem:[%s0 + $0x348] sm:$0xff]
    %v126 = vld [vmem:[%s0 + $0x350] sm:$0xff]
    %v127 = vld [vmem:[%s0 + $0x358] sm:$0xff]
    %v128 = vld [vmem:[%s0 + $0x360] sm:$0xff]
    %v129 = vld [vmem:[%s0 + $0x368] sm:$0xff]
    %v130 = vld [vmem:[%s0 + $0x370] sm:$0xff]
    %v131 = vld [vmem:[%s0 + $0x378] sm:$0xff]
    %v132 = vld [vmem:[%s0 + $0x380] sm:$0xff]
    %v133 = vld [vmem:[%s0 + $0x388] sm:$0xff]
    %v134 = vld [vmem:[%s0 + $0x390] sm:$0xff]
    %v135 = vld [vmem:[%s0 + $0x398] sm:$0xff]
    %v136 = vld [vmem:[%s0 + $0x3a0] sm:$0xff]
    %v137 = vld [vmem:[%s0 + $0x3a8] sm:$0xff]
    %v138 = vld [vmem:[%s0 + $0x3b0] sm:$0xff]
    %v139 = vld [vmem:[%s0 + $0x3b8] sm:$0xff]
    %v140 = vld [vmem:[%s0 + $0x3c0] sm:$0xff]
    %v141 = vld [vmem:[%s0 + $0x3c8] sm:$0xff]
    %v142 = vld [vmem:[%s0 + $0x3d0] sm:$0xff]
    %v143 = vld [vmem:[%s0 + $0x3d8] sm:$0xff]
    %v144 = vld [vmem:[%s0 + $0x3e0] sm:$0xff]
    %v145 = vld [vmem:[%s0 + $0x3e8] sm:$0xff]
    %v146 = vld [vmem:[%s0 + $0x3f0] sm:$0xff]
    %v147 = vld [vmem:[%s0 + $0x3f8] sm:$0xff]
    %v148 = vpack.c.bf16 %v21, %v20
    %v149 = vpack.c.bf16 %v23, %v22
    %v150 = vpack.c.bf16 %v25, %v24
    %v151 = vpack.c.bf16 %v27, %v26
    %v152 = vpack.c.bf16 %v29, %v28
    %v153 = vpack.c.bf16 %v31, %v30
    %v154 = vpack.c.bf16 %v33, %v32
    %v155 = vpack.c.bf16 %v35, %v34
    %v156 = vpack.c.bf16 %v37, %v36
    %v157 = vpack.c.bf16 %v39, %v38
    %v158 = vpack.c.bf16 %v41, %v40
    %v159 = vpack.c.bf16 %v43, %v42
    %v160 = vpack.c.bf16 %v45, %v44
    %v161 = vpack.c.bf16 %v47, %v46
    %v162 = vpack.c.bf16 %v49, %v48
    %v163 = vpack.c.bf16 %v51, %v50
    %v164 = vpack.c.bf16 %v53, %v52
    %v165 = vpack.c.bf16 %v55, %v54
    %v166 = vpack.c.bf16 %v57, %v56
    %v167 = vpack.c.bf16 %v59, %v58
    %v168 = vpack.c.bf16 %v61, %v60
    %v169 = vpack.c.bf16 %v63, %v62
    %v170 = vpack.c.bf16 %v65, %v64
    %v171 = vpack.c.bf16 %v67, %v66
    %v172 = vpack.c.bf16 %v69, %v68
    %v173 = vpack.c.bf16 %v71, %v70
    %v174 = vpack.c.bf16 %v73, %v72
    %v175 = vpack.c.bf16 %v75, %v74
    %v176 = vpack.c.bf16 %v77, %v76
    %v177 = vpack.c.bf16 %v79, %v78
    %v178 = vpack.c.bf16 %v81, %v80
    %v179 = vpack.c.bf16 %v83, %v82
    %v180 = vpack.c.bf16 %v85, %v84
    %v181 = vpack.c.bf16 %v87, %v86
    %v182 = vpack.c.bf16 %v89, %v88
    %v183 = vpack.c.bf16 %v91, %v90
    %v184 = vpack.c.bf16 %v93, %v92
    %v185 = vpack.c.bf16 %v95, %v94
    %v186 = vpack.c.bf16 %v97, %v96
    %v187 = vpack.c.bf16 %v99, %v98
    %v188 = vpack.c.bf16 %v101, %v100
    %v189 = vpack.c.bf16 %v103, %v102
    %v190 = vpack.c.bf16 %v105, %v104
    %v191 = vpack.c.bf16 %v107, %v106
    %v192 = vpack.c.bf16 %v109, %v108
    %v193 = vpack.c.bf16 %v111, %v110
    %v194 = vpack.c.bf16 %v113, %v112
    %v195 = vpack.c.bf16 %v115, %v114
    %v196 = vpack.c.bf16 %v117, %v116
    %v197 = vpack.c.bf16 %v119, %v118
    %v198 = vpack.c.bf16 %v121, %v120
    %v199 = vpack.c.bf16 %v123, %v122
    %v200 = vpack.c.bf16 %v125, %v124
    %v201 = vpack.c.bf16 %v127, %v126
    %v202 = vpack.c.bf16 %v129, %v128
    %v203 = vpack.c.bf16 %v131, %v130
    %v204 = vpack.c.bf16 %v133, %v132
    %v205 = vpack.c.bf16 %v135, %v134
    %v206 = vpack.c.bf16 %v137, %v136
    %v207 = vpack.c.bf16 %v139, %v138
    %v208 = vpack.c.bf16 %v141, %v140
    %v209 = vpack.c.bf16 %v143, %v142
    %v210 = vpack.c.bf16 %v145, %v144
    %v211 = vpack.c.bf16 %v147, %v146
    %v212 = vstv %s19
    %vm213 = vcmask 261120
    %v215 = vsel %vm213, %v18, 0
    %v218 = vsel %vm213, %v148, 0
    %v221 = vsel %vm213, %v149, 0
    %v224 = vsel %vm213, %v150, 0
    %v227 = vsel %vm213, %v151, 0
    %v230 = vsel %vm213, %v152, 0
    %v233 = vsel %vm213, %v153, 0
    %v236 = vsel %vm213, %v154, 0
    %v239 = vsel %vm213, %v155, 0
    %v242 = vsel %vm213, %v156, 0
    %v245 = vsel %vm213, %v157, 0
    %v248 = vsel %vm213, %v158, 0
    %v251 = vsel %vm213, %v159, 0
    %v254 = vsel %vm213, %v160, 0
    %v257 = vsel %vm213, %v161, 0
    %v260 = vsel %vm213, %v162, 0
    %v263 = vsel %vm213, %v163, 0
    %v266 = vsel %vm213, %v164, 0
    %v269 = vsel %vm213, %v165, 0
    %v272 = vsel %vm213, %v166, 0
    %v275 = vsel %vm213, %v167, 0
    %v278 = vsel %vm213, %v168, 0
    %v281 = vsel %vm213, %v169, 0
    %v284 = vsel %vm213, %v170, 0
    %v287 = vsel %vm213, %v171, 0
    %v290 = vsel %vm213, %v172, 0
    %v293 = vsel %vm213, %v173, 0
    %v296 = vsel %vm213, %v174, 0
    %v299 = vsel %vm213, %v175, 0
    %v302 = vsel %vm213, %v176, 0
    %v305 = vsel %vm213, %v177, 0
    %v308 = vsel %vm213, %v178, 0
    %v311 = vsel %vm213, %v179, 0
    %v314 = vsel %vm213, %v180, 0
    %v317 = vsel %vm213, %v181, 0
    %v320 = vsel %vm213, %v182, 0
    %v323 = vsel %vm213, %v183, 0
    %v326 = vsel %vm213, %v184, 0
    %v329 = vsel %vm213, %v185, 0
    %v332 = vsel %vm213, %v186, 0
    %v335 = vsel %vm213, %v187, 0
    %v338 = vsel %vm213, %v188, 0
    %v341 = vsel %vm213, %v189, 0
    %v344 = vsel %vm213, %v190, 0
    %v347 = vsel %vm213, %v191, 0
    %v350 = vsel %vm213, %v192, 0
    %v353 = vsel %vm213, %v193, 0
    %v356 = vsel %vm213, %v194, 0
    %v359 = vsel %vm213, %v195, 0
    %v362 = vsel %vm213, %v196, 0
    %v365 = vsel %vm213, %v197, 0
    %v368 = vsel %vm213, %v198, 0
    %v371 = vsel %vm213, %v199, 0
    %v374 = vsel %vm213, %v200, 0
    %v377 = vsel %vm213, %v201, 0
    %v380 = vsel %vm213, %v202, 0
    %v383 = vsel %vm213, %v203, 0
    %v386 = vsel %vm213, %v204, 0
    %v389 = vsel %vm213, %v205, 0
    %v392 = vsel %vm213, %v206, 0
    %v395 = vsel %vm213, %v207, 0
    %v398 = vsel %vm213, %v208, 0
    %v401 = vsel %vm213, %v209, 0
    %v404 = vsel %vm213, %v210, 0
    %v407 = vsel %vm213, %v211, 0
    %409 = vmatprep.subr.bf16.mxu0 0
    %410 = vmatpush1.bf16.xpose.msra.mxu0 %v218
    %411 = vmatprep.subr.bf16.mxu0 0
    %412 = vmatpush1.bf16.xpose.msra.mxu0 %v221
    %413 = vmatprep.subr.bf16.mxu0 0
    %414 = vmatpush1.bf16.xpose.msra.mxu0 %v224
    %415 = vmatprep.subr.bf16.mxu0 0
    %416 = vmatpush1.bf16.xpose.msra.mxu0 %v227
    %417 = vmatprep.subr.bf16.mxu0 0
    %418 = vmatpush1.bf16.xpose.msra.mxu0 %v230
    %419 = vmatprep.subr.bf16.mxu0 0
    %420 = vmatpush1.bf16.xpose.msra.mxu0 %v233
    %421 = vmatprep.subr.bf16.mxu0 0
    %422 = vmatpush1.bf16.xpose.msra.mxu0 %v236
    %423 = vmatprep.subr.bf16.mxu0 0
    %424 = vmatpush1.bf16.xpose.msra.mxu0 %v239
    %425 = vmatprep.subr.bf16.mxu0 0
    %426 = vmatpush1.bf16.xpose.msra.mxu0 %v242
    %427 = vmatprep.subr.bf16.mxu0 0
    %428 = vmatpush1.bf16.xpose.msra.mxu0 %v245
    %429 = vmatprep.subr.bf16.mxu0 0
    %430 = vmatpush1.bf16.xpose.msra.mxu0 %v248
    %431 = vmatprep.subr.bf16.mxu0 0
    %432 = vmatpush1.bf16.xpose.msra.mxu0 %v251
    %433 = vmatprep.subr.bf16.mxu0 0
    %434 = vmatpush1.bf16.xpose.msra.mxu0 %v254
    %435 = vmatprep.subr.bf16.mxu0 0
    %436 = vmatpush1.bf16.xpose.msra.mxu0 %v257
    %437 = vmatprep.subr.bf16.mxu0 0
    %438 = vmatpush1.bf16.xpose.msra.mxu0 %v260
    %439 = vmatprep.subr.bf16.mxu0 0
    %440 = vmatpush1.bf16.xpose.msra.mxu0 %v263
    %441 = vmatprep.mubr.bf16.mxu0 0
    %442 = vmatmul.mubr.bf16.gmra.mrb[0].mxu0 %v215
    %v443 = vpop.f32.mrb[0].mxu0
    %v444 = vadd.f32 %v212, %v443
    %v445 = vpop.f32.mrb[0].mxu0
    %v446 = vadd.f32 %v212, %v445
    %v447 = vpop.f32.mrb[0].mxu0
    %v448 = vpop.f32.mrb[0].mxu0
    %449 = vdwg.mxu0
    %450 = vmatprep.subr.bf16.mxu0 0
    %451 = vmatpush1.bf16.xpose.msra.mxu0 %v266
    %452 = vmatprep.subr.bf16.mxu0 0
    %453 = vmatpush1.bf16.xpose.msra.mxu0 %v269
    %454 = vmatprep.subr.bf16.mxu0 0
    %455 = vmatpush1.bf16.xpose.msra.mxu0 %v272
    %456 = vmatprep.subr.bf16.mxu0 0
    %457 = vmatpush1.bf16.xpose.msra.mxu0 %v275
    %458 = vmatprep.subr.bf16.mxu0 0
    %459 = vmatpush1.bf16.xpose.msra.mxu0 %v278
    %460 = vmatprep.subr.bf16.mxu0 0
    %461 = vmatpush1.bf16.xpose.msra.mxu0 %v281
    %462 = vmatprep.subr.bf16.mxu0 0
    %463 = vmatpush1.bf16.xpose.msra.mxu0 %v284
    %464 = vmatprep.subr.bf16.mxu0 0
    %465 = vmatpush1.bf16.xpose.msra.mxu0 %v287
    %466 = vmatprep.subr.bf16.mxu0 0
    %467 = vmatpush1.bf16.xpose.msra.mxu0 %v290
    %468 = vmatprep.subr.bf16.mxu0 0
    %469 = vmatpush1.bf16.xpose.msra.mxu0 %v293
    %470 = vmatprep.subr.bf16.mxu0 0
    %471 = vmatpush1.bf16.xpose.msra.mxu0 %v296
    %472 = vmatprep.subr.bf16.mxu0 0
    %473 = vmatpush1.bf16.xpose.msra.mxu0 %v299
    %474 = vmatprep.subr.bf16.mxu0 0
    %475 = vmatpush1.bf16.xpose.msra.mxu0 %v302
    %476 = vmatprep.subr.bf16.mxu0 0
    %477 = vmatpush1.bf16.xpose.msra.mxu0 %v305
    %478 = vmatprep.subr.bf16.mxu0 0
    %479 = vmatpush1.bf16.xpose.msra.mxu0 %v308
    %480 = vmatprep.subr.bf16.mxu0 0
    %481 = vmatpush1.bf16.xpose.msra.mxu0 %v311
    %482 = vmatprep.mubr.bf16.mxu0 0
    %483 = vmatmul.mubr.bf16.gmra.mrb[0].mxu0 %v215
    %v484 = vpop.f32.mrb[0].mxu0
    %v485 = vadd.f32 %v212, %v484
    %v486 = vpop.f32.mrb[0].mxu0
    %v487 = vadd.f32 %v212, %v486
    %v488 = vpop.f32.mrb[0].mxu0
    %v489 = vpop.f32.mrb[0].mxu0
    %490 = vdwg.mxu0
    %491 = vmatprep.subr.bf16.mxu0 0
    %492 = vmatpush1.bf16.xpose.msra.mxu0 %v314
    %493 = vmatprep.subr.bf16.mxu0 0
    %494 = vmatpush1.bf16.xpose.msra.mxu0 %v317
    %495 = vmatprep.subr.bf16.mxu0 0
    %496 = vmatpush1.bf16.xpose.msra.mxu0 %v320
    %497 = vmatprep.subr.bf16.mxu0 0
    %498 = vmatpush1.bf16.xpose.msra.mxu0 %v323
    %499 = vmatprep.subr.bf16.mxu0 0
    %500 = vmatpush1.bf16.xpose.msra.mxu0 %v326
    %501 = vmatprep.subr.bf16.mxu0 0
    %502 = vmatpush1.bf16.xpose.msra.mxu0 %v329
    %503 = vmatprep.subr.bf16.mxu0 0
    %504 = vmatpush1.bf16.xpose.msra.mxu0 %v332
    %505 = vmatprep.subr.bf16.mxu0 0
    %506 = vmatpush1.bf16.xpose.msra.mxu0 %v335
    %507 = vmatprep.subr.bf16.mxu0 0
    %508 = vmatpush1.bf16.xpose.msra.mxu0 %v338
    %509 = vmatprep.subr.bf16.mxu0 0
    %510 = vmatpush1.bf16.xpose.msra.mxu0 %v341
    %511 = vmatprep.subr.bf16.mxu0 0
    %512 = vmatpush1.bf16.xpose.msra.mxu0 %v344
    %513 = vmatprep.subr.bf16.mxu0 0
    %514 = vmatpush1.bf16.xpose.msra.mxu0 %v347
    %515 = vmatprep.subr.bf16.mxu0 0
    %516 = vmatpush1.bf16.xpose.msra.mxu0 %v350
    %517 = vmatprep.subr.bf16.mxu0 0
    %518 = vmatpush1.bf16.xpose.msra.mxu0 %v353
    %519 = vmatprep.subr.bf16.mxu0 0
    %520 = vmatpush1.bf16.xpose.msra.mxu0 %v356
    %521 = vmatprep.subr.bf16.mxu0 0
    %522 = vmatpush1.bf16.xpose.msra.mxu0 %v359
    %523 = vmatprep.mubr.bf16.mxu0 0
    %524 = vmatmul.mubr.bf16.gmra.mrb[0].mxu0 %v215
    %v525 = vpop.f32.mrb[0].mxu0
    %v526 = vadd.f32 %v212, %v525
    %v527 = vpop.f32.mrb[0].mxu0
    %v528 = vadd.f32 %v212, %v527
    %v529 = vpop.f32.mrb[0].mxu0
    %v530 = vpop.f32.mrb[0].mxu0
    %531 = vdwg.mxu0
    %532 = vmatprep.subr.bf16.mxu0 0
    %533 = vmatpush1.bf16.xpose.msra.mxu0 %v362
    %534 = vmatprep.subr.bf16.mxu0 0
    %535 = vmatpush1.bf16.xpose.msra.mxu0 %v365
    %536 = vmatprep.subr.bf16.mxu0 0
    %537 = vmatpush1.bf16.xpose.msra.mxu0 %v368
    %538 = vmatprep.subr.bf16.mxu0 0
    %539 = vmatpush1.bf16.xpose.msra.mxu0 %v371
    %540 = vmatprep.subr.bf16.mxu0 0
    %541 = vmatpush1.bf16.xpose.msra.mxu0 %v374
    %542 = vmatprep.subr.bf16.mxu0 0
    %543 = vmatpush1.bf16.xpose.msra.mxu0 %v377
    %544 = vmatprep.subr.bf16.mxu0 0
    %545 = vmatpush1.bf16.xpose.msra.mxu0 %v380
    %546 = vmatprep.subr.bf16.mxu0 0
    %547 = vmatpush1.bf16.xpose.msra.mxu0 %v383
    %548 = vmatprep.subr.bf16.mxu0 0
    %549 = vmatpush1.bf16.xpose.msra.mxu0 %v386
    %550 = vmatprep.subr.bf16.mxu0 0
    %551 = vmatpush1.bf16.xpose.msra.mxu0 %v389
    %552 = vmatprep.subr.bf16.mxu0 0
    %553 = vmatpush1.bf16.xpose.msra.mxu0 %v392
    %554 = vmatprep.subr.bf16.mxu0 0
    %555 = vmatpush1.bf16.xpose.msra.mxu0 %v395
    %556 = vmatprep.subr.bf16.mxu0 0
    %557 = vmatpush1.bf16.xpose.msra.mxu0 %v398
    %558 = vmatprep.subr.bf16.mxu0 0
    %559 = vmatpush1.bf16.xpose.msra.mxu0 %v401
    %560 = vmatprep.subr.bf16.mxu0 0
    %561 = vmatpush1.bf16.xpose.msra.mxu0 %v404
    %562 = vmatprep.subr.bf16.mxu0 0
    %563 = vmatpush1.bf16.xpose.msra.mxu0 %v407
    %564 = vmatprep.mubr.bf16.mxu0 0
    %565 = vmatmul.mubr.bf16.gmra.mrb[0].mxu0 %v215
    %v566 = vpop.f32.mrb[0].mxu0
    %v567 = vadd.f32 %v212, %v566
    %v568 = vpop.f32.mrb[0].mxu0
    %v569 = vadd.f32 %v212, %v568
    %v570 = vpop.f32.mrb[0].mxu0
    %v571 = vpop.f32.mrb[0].mxu0
    %572 = vdwg.mxu0
    %v573 = vand.u32 2147483647, %v444
    %v574 = vand.u32 2147483647, %v446
    %v575 = vand.u32 2147483647, %v485
    %v576 = vand.u32 2147483647, %v487
    %v577 = vand.u32 2147483647, %v526
    %v578 = vand.u32 2147483647, %v528
    %v579 = vand.u32 2147483647, %v567
    %v580 = vand.u32 2147483647, %v569
    %v581 = vsub.f32 0.0, %v573
    %v582 = vsub.f32 0.0, %v574
    %v583 = vsub.f32 0.0, %v575
    %v584 = vsub.f32 0.0, %v576
    %v585 = vsub.f32 0.0, %v577
    %v586 = vsub.f32 0.0, %v578
    %v587 = vsub.f32 0.0, %v579
    %v588 = vsub.f32 0.0, %v580
    %v589 = vmul.f32 %v581, 1.442695
    %v590 = vpow.pop %v589
    %v591 = vmul.f32 %v582, 1.442695
    %v592 = vpow.pop %v591
    %v593 = vmul.f32 %v583, 1.442695
    %v594 = vpow.pop %v593
    %v595 = vmul.f32 %v584, 1.442695
    %v596 = vpow.pop %v595
    %v597 = vmul.f32 %v585, 1.442695
    %v598 = vpow.pop %v597
    %v599 = vmul.f32 %v586, 1.442695
    %v600 = vpow.pop %v599
    %v601 = vmul.f32 %v587, 1.442695
    %v602 = vpow.pop %v601
    %v603 = vmul.f32 %v588, 1.442695
    %v604 = vpow.pop %v603
    %v605 = vadd.f32 %v590, 1.0
    %v606 = vadd.f32 %v592, 1.0
    %v607 = vadd.f32 %v594, 1.0
    %v608 = vadd.f32 %v596, 1.0
    %v609 = vadd.f32 %v598, 1.0
    %v610 = vadd.f32 %v600, 1.0
    %v611 = vadd.f32 %v602, 1.0
    %v612 = vadd.f32 %v604, 1.0
    %v613 = vrcp.pop %v605
    %v614 = vrcp.pop %v606
    %v615 = vrcp.pop %v607
    %v616 = vrcp.pop %v608
    %v617 = vrcp.pop %v609
    %v618 = vrcp.pop %v610
    %v619 = vrcp.pop %v611
    %v620 = vrcp.pop %v612
    %vm621 = vcmp.ge.f32.partialorder %v444, 0.0
    %vm622 = vcmp.ge.f32.partialorder %v446, 0.0
    %vm623 = vcmp.ge.f32.partialorder %v485, 0.0
    %vm624 = vcmp.ge.f32.partialorder %v487, 0.0
    %vm625 = vcmp.ge.f32.partialorder %v526, 0.0
    %vm626 = vcmp.ge.f32.partialorder %v528, 0.0
    %vm627 = vcmp.ge.f32.partialorder %v567, 0.0
    %vm628 = vcmp.ge.f32.partialorder %v569, 0.0
    %v629 = vmul.f32 %v590, %v613
    %v630 = vmul.f32 %v592, %v614
    %v631 = vmul.f32 %v594, %v615
    %v632 = vmul.f32 %v596, %v616
    %v633 = vmul.f32 %v598, %v617
    %v634 = vmul.f32 %v600, %v618
    %v635 = vmul.f32 %v602, %v619
    %v636 = vmul.f32 %v604, %v620
    %v637 = vsel %vm621, %v613, %v629
    %v638 = vsel %vm622, %v614, %v630
    %v639 = vsel %vm623, %v615, %v631
    %v640 = vsel %vm624, %v616, %v632
    %v641 = vsel %vm625, %v617, %v633
    %v642 = vsel %vm626, %v618, %v634
    %v643 = vsel %vm627, %v619, %v635
    %v644 = vsel %vm628, %v620, %v636
    %v653 = vcombine.low %v637, %v638
    %v654 = vcombine.low %v639, %v640
    %v655 = vcombine.low %v641, %v642
    %v656 = vcombine.low %v643, %v644
    %v658 = vunpack.c.l.s4 1966171168
    %v659 = vunpack.c.0.s8 %v658
    %v660 = vlaneseq
    %v661 = vshrl.u32 %v660, 7
    %v662 = vsub.s32 %v659, %v661
    %v663 = vrot.slane %v653, %v662
    %v665 = vunpack.c.l.s4 1966171168
    %v666 = vunpack.c.0.s8 %v665
    %v667 = vlaneseq
    %v668 = vshrl.u32 %v667, 7
    %v669 = vsub.s32 %v666, %v668
    %v670 = vrot.slane %v654, %v669
    %v672 = vunpack.c.l.s4 1966171168
    %v673 = vunpack.c.0.s8 %v672
    %v674 = vlaneseq
    %v675 = vshrl.u32 %v674, 7
    %v676 = vsub.s32 %v673, %v675
    %v677 = vrot.slane %v655, %v676
    %v679 = vunpack.c.l.s4 1966171168
    %v680 = vunpack.c.0.s8 %v679
    %v681 = vlaneseq
    %v682 = vshrl.u32 %v681, 7
    %v683 = vsub.s32 %v680, %v682
    %v684 = vrot.slane %v656, %v683
    %v685 = vcombine.low %v663, %v670
    %v686 = vcombine.low %v677, %v684
    %v688 = vunpack.c.l.s4 1966171168
    %v689 = vunpack.c.0.s8 %v688
    %v690 = vlaneseq
    %v691 = vshrl.u32 %v690, 7
    %v692 = vsub.s32 %v689, %v691
    %v693 = vrot.slane %v685, %v692
    %v695 = vunpack.c.l.s4 1966171168
    %v696 = vunpack.c.0.s8 %v695
    %v697 = vlaneseq
    %v698 = vshrl.u32 %v697, 7
    %v699 = vsub.s32 %v696, %v698
    %v700 = vrot.slane %v686, %v699
    %v701 = vcombine.low %v693, %v700
    %703 = vst [vmem:[#allocation3] sm:$0xff] %v701
    // Predicated region
    $region14: #{tpu_custom_call.1} parent=1 // pred_check
      _
    $region15: #{tpu_custom_call.1} parent=1 // pred_check_branch
      %705 = sbr.rel (0) target = $region17
    $region16: #{tpu_custom_call.1} parent=1 // pred_region
      %s707 = ssub.s32 128, 128
      %708 = vsyncadd [#allocation4], %s707
      %s710 = sshll.u32 [#allocation3], 4
      %s711 = int_to_ptr.vmem [resolvable:$true] %s710
      %713 = dma.vmem_to_hbm [thread:$0]  %s711, 128, %s3, [#allocation4]
    $region17: #{tpu_custom_call.1} parent=1 // pred_fallthru
      _
    // Predicated region
    $region18: #{tpu_custom_call.1} parent=1 // pred_check
      _
    $region19: #{tpu_custom_call.1} parent=1 // pred_check_branch
      %715 = sbr.rel (0) target = $region21
    $region20: #{tpu_custom_call.1} parent=1 // pred_region
      %716 = dma.done [#allocation4], 128
    $region21: #{tpu_custom_call.1} parent=1 // pred_fallthru
      _
    %717 = vsyncpa [#allocation4], 1

</llo_original>
